<compile_context>
chip_gen: v6e
topology: v6e:2x2x1
jax: 0.10.0
libtpu: 0.0.40
codegen_flags: <defaults>
</compile_context>

<pallas_src>
import functools

import jax
import jax.numpy as jnp
from jax import lax
from jax.experimental import pallas as pl
from jax.experimental.pallas import tpu as pltpu

_BIG = 1.0e9                      # finite sentinel: avoids inf-inf = NaN
_VMEM_LIMIT = 48 * 1024 * 1024    # below v7x 64 MiB physical, above all defaults


def _dist_bias_kernel(emb_full_ref, emb_rows_ref, lab_row_ref, lab_col_ref,
                      apb_ref, anb_ref, *, n_real, margin, tr):
    """Normalize + one (TR,Bp) Gram/distance row tile + sentinel-biased outputs."""
    r = pl.program_id(0)

    def _l2_normalize(x):
        sq = jnp.sum(x * x, axis=1, keepdims=True)
        return x * lax.rsqrt(jnp.maximum(sq, 1e-24))    # == x / max(||x||, 1e-12)

    en_full = _l2_normalize(emb_full_ref[...].astype(jnp.float32))    # (Bp, E)
    en_rows = _l2_normalize(emb_rows_ref[...].astype(jnp.float32))    # (TR, E)

    # MXU row-tile Gram (contracts E without transposing).
    gram = lax.dot_general(en_rows, en_full, (((1,), (1,)), ((), ())),
                           preferred_element_type=jnp.float32)        # (TR, Bp)
    d = jnp.sqrt(jnp.maximum(2.0 - 2.0 * gram, 0.0))

    trb, bp = d.shape
    row_ids = r * tr + lax.broadcasted_iota(jnp.int32, (trb, bp), 0)
    col_ids = lax.broadcasted_iota(jnp.int32, (trb, bp), 1)
    same = lab_col_ref[...] == lab_row_ref[...]          # (TR,1)==(1,Bp) -> (TR,Bp)
    in_range = (row_ids < n_real) & (col_ids < n_real)   # drop padded rows/cols
    pos = same & (row_ids != col_ids) & in_range
    neg = jnp.logical_not(same) & in_range

    apb_ref[...] = jnp.where(pos, d + margin, _BIG)      # margin pre-folded
    anb_ref[...] = jnp.where(neg, d, -_BIG)


def _mine_kernel(apb_ref, anb_ref, sum_ref, cnt_ref, *, margin):
    """Semihard mining + loss: accumulate lane-shaped (1,Bp) partials per p-tile."""
    n = pl.program_id(1)

    @pl.when(n == 0)
    def _init():
        sum_ref[...] = jnp.zeros_like(sum_ref)
        cnt_ref[...] = jnp.zeros_like(cnt_ref)

    apb = apb_ref[...]                 # (TP, 1, Bp)  positives: p outer, anchors on lanes
    anb = anb_ref[...]                 # (1, TN, Bp)  negatives: n sublanes, anchors on lanes
    loss = apb - anb                   # (TP, TN, Bp) = margin + D[a,p] - D[a,n] (if valid)
    valid = (loss > 0.0) & (loss < margin)       # sentinels push invalid pairs out of range
    vf = valid.astype(jnp.float32)

    # reduce over p (outer, VALU adds) and n (sublanes, XLU); keep the anchor lanes
    sum_ref[...] += jnp.sum(jnp.sum(loss * vf, axis=0), axis=0, keepdims=True)
    cnt_ref[...] += jnp.sum(jnp.sum(vf, axis=0), axis=0, keepdims=True)


def triplet_loss_supervised(embeddings, labels, margin=0.5):
    """Pallas TPU implementation of TripletLossSupervised.forward."""
    B, E = embeddings.shape
    labels = labels.astype(jnp.int32)
    margin = float(margin)

    # Pad to lane-dense sizes (multiples of 128). Padded rows are neutralized by the
    # in_range masks in kernel 1; zero-padded feature columns change nothing.
    Bp = max(128, ((B + 127) // 128) * 128)
    Ep = max(128, ((E + 127) // 128) * 128)
    emb = embeddings.astype(jnp.float32)
    if (Bp, Ep) != (B, E):
        emb = jnp.pad(emb, ((0, Bp - B), (0, Ep - E)))
    lab = labels
    if Bp != B:
        lab = jnp.pad(lab, (0, Bp - B), constant_values=-1)
    lab_row = lab.reshape(1, Bp)
    lab_col = lab.reshape(Bp, 1)

    # --- Kernel 1: normalize + Gram + sentinel-biased distance matrices ----------
    TR = 256 if Bp % 256 == 0 else 128
    k1 = functools.partial(_dist_bias_kernel, n_real=B, margin=margin, tr=TR)
    apb, anb = pl.pallas_call(
        k1,
        out_shape=(jax.ShapeDtypeStruct((Bp, Bp), jnp.float32),
                   jax.ShapeDtypeStruct((Bp, Bp), jnp.float32)),
        grid_spec=pltpu.PrefetchScalarGridSpec(
            num_scalar_prefetch=0,
            grid=(Bp // TR,),
            in_specs=[
                pl.BlockSpec((Bp, Ep), lambda r: (0, 0)),   # full (normalized) RHS
                pl.BlockSpec((TR, Ep), lambda r: (r, 0)),   # row tile (LHS)
                pl.BlockSpec((1, Bp), lambda r: (0, 0)),    # labels as a row
                pl.BlockSpec((TR, 1), lambda r: (r, 0)),    # labels of the tile rows
            ],
            out_specs=[pl.BlockSpec((TR, Bp), lambda r: (r, 0)),
                       pl.BlockSpec((TR, Bp), lambda r: (r, 0))],
        ),
        compiler_params=pltpu.CompilerParams(
            dimension_semantics=("parallel",),
            vmem_limit_bytes=_VMEM_LIMIT),
    )(emb, emb, lab_row, lab_col)

    # Both matrices are symmetric, so loss[a,p,n] = apb[p,a] - anb[n,a]: the anchor
    # axis sits on lanes for BOTH operands -> every mining block is lane-dense.
    apb3 = apb.reshape(Bp, 1, Bp)      # p outer, anchors on lanes   (free reshape)
    anb3 = anb.reshape(1, Bp, Bp)      # n on sublanes, anchors on lanes

    # --- Kernel 2: O(B^3) semihard mining + loss accumulation --------------------
    TP = 32                            # p rows per step (outer dim of the work slab)
    TN = Bp                            # n rows per step; shrink so slab stays ~2 MiB
    while TP * TN * Bp * 4 > (2 << 20) and TN % 16 == 0:
        TN //= 2
    num_p = Bp // TP
    num_n = Bp // TN

    k2 = functools.partial(_mine_kernel, margin=margin)
    sums, cnts = pl.pallas_call(
        k2,
        out_shape=(jax.ShapeDtypeStruct((num_p, Bp), jnp.float32),
                   jax.ShapeDtypeStruct((num_p, Bp), jnp.float32)),
        grid_spec=pltpu.PrefetchScalarGridSpec(
            num_scalar_prefetch=0,
            grid=(num_p, num_n),                              # n innermost (reduction)
            in_specs=[
                pl.BlockSpec((TP, 1, Bp), lambda p, n: (p, 0, 0)),  # positives (biased)
                pl.BlockSpec((1, TN, Bp), lambda p, n: (0, n, 0)),  # negatives (biased)
            ],
            out_specs=[pl.BlockSpec((1, Bp), lambda p, n: (p, 0)),  # per-p-tile partial sum
                       pl.BlockSpec((1, Bp), lambda p, n: (p, 0))], # per-p-tile partial count
        ),
        compiler_params=pltpu.CompilerParams(
            dimension_semantics=("parallel", "arbitrary"),    # p splits across TCs on v7x
            vmem_limit_bytes=_VMEM_LIMIT),
    )(apb3, anb3)

    total_sum = jnp.sum(sums)
    total_cnt = jnp.sum(cnts)
    return jnp.where(total_cnt > 0.0, total_sum / jnp.maximum(total_cnt, 1.0), 0.0)
    # TODO(synk): labels.cpu() in the PyTorch forward is a host-transfer no-op; omitted.
    # TODO(synk): kernel-1/kernel-2 fusion for tiny batches (skip the HBM roundtrip of
    #             apb/anb) not done; two-call structure kept for generality.


def _reference(embeddings, labels, margin):
    """Pure-JAX reference of the same math (sanity check)."""
    en = embeddings / jnp.maximum(
        jnp.sqrt(jnp.sum(embeddings * embeddings, axis=1, keepdims=True)), 1e-12)
    gram = en @ en.T
    dist = jnp.sqrt(jnp.maximum(2.0 - 2.0 * gram, 0.0))
    B = embeddings.shape[0]
    same = labels[:, None] == labels[None, :]
    eye = jnp.eye(B, dtype=bool)
    ap_mask = same & ~eye
    an_mask = ~same
    diff = dist[:, None, :] - dist[:, :, None]            # [a, p, n] = D[a,n]-D[a,p]
    valid = ap_mask[:, :, None] & an_mask[:, None, :] & (diff > 0.0) & (diff < margin)
    losses = jnp.where(valid, margin - diff, 0.0)
    cnt = jnp.sum(valid)
    return jnp.where(cnt > 0, jnp.sum(losses) / jnp.maximum(cnt, 1), 0.0)


if __name__ == "__main__":
    key = jax.random.PRNGKey(0)
    k1, k2 = jax.random.split(key)
    B, E = 16, 32
    embeddings = jax.random.normal(k1, (B, E), dtype=jnp.float32)
    labels = jax.random.randint(k2, (B,), 0, 4, dtype=jnp.int32)

    loss = triplet_loss_supervised(embeddings, labels, margin=0.5)
    loss = jax.block_until_ready(loss)

    ref = jax.block_until_ready(_reference(embeddings, labels, 0.5))
    assert abs(float(loss) - float(ref)) < 1e-4, (float(loss), float(ref))
    print("KERNEL_OK")
</pallas_src>

<mosaic_0001>
module attributes {stable_mosaic.version = 11 : i64} {
  func.func @_dist_bias_kernel(%arg0: i32, %arg1: memref<128x128xf32, #tpu.memory_space<vmem>>, %arg2: memref<128x128xf32, #tpu.memory_space<vmem>>, %arg3: memref<1x128xi32, #tpu.memory_space<vmem>>, %arg4: memref<128x1xi32, #tpu.memory_space<vmem>>, %arg5: memref<128x128xf32, #tpu.memory_space<vmem>>, %arg6: memref<128x128xf32, #tpu.memory_space<vmem>>) attributes {dimension_semantics = [#tpu.dimension_semantics<parallel>], iteration_bounds = array<i64: 1>, scalar_prefetch = 0 : i64, scratch_operands = 0 : i64, tpu.core_type = #tpu.core_type<tc>, window_params = [{pipeline_mode = #tpu.pipeline_mode<synchronous>, transform_indices = @transform_0, window_bounds = array<i64: 128, 128>}, {transform_indices = @transform_1, window_bounds = array<i64: 128, 128>}, {pipeline_mode = #tpu.pipeline_mode<synchronous>, transform_indices = @transform_2, window_bounds = array<i64: 1, 128>}, {transform_indices = @transform_3, window_bounds = array<i64: 128, 1>}, {transform_indices = @transform_4, window_bounds = array<i64: 128, 128>}, {transform_indices = @transform_5, window_bounds = array<i64: 128, 128>}]} {
    %c0 = arith.constant 0 : index
    %c0_0 = arith.constant 0 : index
    %0 = vector.load %arg1[%c0, %c0_0] : memref<128x128xf32, #tpu.memory_space<vmem>>, vector<128x128xf32>
    %1 = arith.mulf %0, %0 : vector<128x128xf32>
    %cst = arith.constant dense<0.000000e+00> : vector<128xf32>
    %2 = vector.multi_reduction <add>, %1, %cst [1] : vector<128x128xf32> to vector<128xf32>
    %3 = vector.shape_cast %2 : vector<128xf32> to vector<128x1xf32>
    %cst_1 = arith.constant 1.000000e-24 : f32
    %4 = vector.broadcast %cst_1 : f32 to vector<128x1xf32>
    %5 = arith.maximumf %3, %4 : vector<128x1xf32>
    %6 = math.rsqrt %5 : vector<128x1xf32>
    %7 = vector.broadcast %6 : vector<128x1xf32> to vector<128x128xf32>
    %8 = arith.mulf %0, %7 : vector<128x128xf32>
    %c0_2 = arith.constant 0 : index
    %c0_3 = arith.constant 0 : index
    %9 = vector.load %arg2[%c0_2, %c0_3] : memref<128x128xf32, #tpu.memory_space<vmem>>, vector<128x128xf32>
    %10 = arith.mulf %9, %9 : vector<128x128xf32>
    %cst_4 = arith.constant dense<0.000000e+00> : vector<128xf32>
    %11 = vector.multi_reduction <add>, %10, %cst_4 [1] : vector<128x128xf32> to vector<128xf32>
    %12 = vector.shape_cast %11 : vector<128xf32> to vector<128x1xf32>
    %cst_5 = arith.constant 1.000000e-24 : f32
    %13 = vector.broadcast %cst_5 : f32 to vector<128x1xf32>
    %14 = arith.maximumf %12, %13 : vector<128x1xf32>
    %15 = math.rsqrt %14 : vector<128x1xf32>
    %16 = vector.broadcast %15 : vector<128x1xf32> to vector<128x128xf32>
    %17 = arith.mulf %9, %16 : vector<128x128xf32>
    %cst_6 = arith.constant dense<0.000000e+00> : vector<128x128xf32>
    %18 = tpu.matmul %17, %8, %cst_6 {dimension_numbers = #tpu.dot_dimension_numbers<[1], [1], [0], [0], [0, 0, 1, 0], [], []>} : vector<128x128xf32>, vector<128x128xf32>, vector<128x128xf32> -> vector<128x128xf32>
    %cst_7 = arith.constant 2.000000e+00 : f32
    %19 = vector.broadcast %cst_7 : f32 to vector<128x128xf32>
    %20 = arith.mulf %19, %18 : vector<128x128xf32>
    %cst_8 = arith.constant 2.000000e+00 : f32
    %21 = vector.broadcast %cst_8 : f32 to vector<128x128xf32>
    %22 = arith.subf %21, %20 : vector<128x128xf32>
    %cst_9 = arith.constant 0.000000e+00 : f32
    %23 = vector.broadcast %cst_9 : f32 to vector<128x128xf32>
    %24 = arith.maximumf %22, %23 : vector<128x128xf32>
    %25 = math.sqrt %24 : vector<128x128xf32>
    %c128_i32 = arith.constant 128 : i32
    %26 = arith.muli %arg0, %c128_i32 : i32
    %27 = tpu.iota {dimensions = array<i32: 0>} : vector<128x128xi32>
    %28 = vector.broadcast %26 : i32 to vector<128x128xi32>
    %29 = arith.addi %28, %27 : vector<128x128xi32>
    %30 = tpu.iota {dimensions = array<i32: 1>} : vector<128x128xi32>
    %c0_10 = arith.constant 0 : index
    %c0_11 = arith.constant 0 : index
    %31 = vector.load %arg4[%c0_10, %c0_11] : memref<128x1xi32, #tpu.memory_space<vmem>>, vector<128x1xi32>
    %c0_12 = arith.constant 0 : index
    %c0_13 = arith.constant 0 : index
    %32 = vector.load %arg3[%c0_12, %c0_13] : memref<1x128xi32, #tpu.memory_space<vmem>>, vector<1x128xi32>
    %33 = vector.broadcast %31 : vector<128x1xi32> to vector<128x128xi32>
    %34 = vector.broadcast %32 : vector<1x128xi32> to vector<128x128xi32>
    %35 = arith.cmpi eq, %33, %34 : vector<128x128xi32>
    %c16_i32 = arith.constant 16 : i32
    %36 = vector.broadcast %c16_i32 : i32 to vector<128x128xi32>
    %37 = arith.cmpi slt, %29, %36 : vector<128x128xi32>
    %c16_i32_14 = arith.constant 16 : i32
    %38 = vector.broadcast %c16_i32_14 : i32 to vector<128x128xi32>
    %39 = arith.cmpi slt, %30, %38 : vector<128x128xi32>
    %40 = arith.andi %37, %39 : vector<128x128xi1>
    %41 = arith.cmpi ne, %29, %30 : vector<128x128xi32>
    %42 = arith.andi %35, %41 : vector<128x128xi1>
    %43 = arith.andi %42, %40 : vector<128x128xi1>
    %cst_15 = arith.constant dense<true> : vector<128x128xi1>
    %44 = arith.xori %35, %cst_15 : vector<128x128xi1>
    %45 = arith.andi %44, %40 : vector<128x128xi1>
    %cst_16 = arith.constant 5.000000e-01 : f32
    %46 = vector.broadcast %cst_16 : f32 to vector<128x128xf32>
    %47 = arith.addf %25, %46 : vector<128x128xf32>
    %cst_17 = arith.constant 1.000000e+09 : f32
    %48 = vector.broadcast %cst_17 : f32 to vector<128x128xf32>
    %49 = arith.select %43, %47, %48 : vector<128x128xi1>, vector<128x128xf32>
    %c0_18 = arith.constant 0 : index
    %c0_19 = arith.constant 0 : index
    %50 = vector.load %arg5[%c0_18, %c0_19] : memref<128x128xf32, #tpu.memory_space<vmem>>, vector<128x128xf32>
    tpu.vector_store %arg5[%c0_18, %c0_19], %49 {strides = array<i32>} : memref<128x128xf32, #tpu.memory_space<vmem>>, vector<128x128xf32>,
    %cst_20 = arith.constant -1.000000e+09 : f32
    %51 = vector.broadcast %cst_20 : f32 to vector<128x128xf32>
    %52 = arith.select %45, %25, %51 : vector<128x128xi1>, vector<128x128xf32>
    %c0_21 = arith.constant 0 : index
    %c0_22 = arith.constant 0 : index
    %53 = vector.load %arg6[%c0_21, %c0_22] : memref<128x128xf32, #tpu.memory_space<vmem>>, vector<128x128xf32>
    tpu.vector_store %arg6[%c0_21, %c0_22], %52 {strides = array<i32>} : memref<128x128xf32, #tpu.memory_space<vmem>>, vector<128x128xf32>,
    return
  }
  func.func @transform_0(%arg0: i32) -> (i32, i32) {
    %c0_i32 = arith.constant 0 : i32
    %c0_i32_0 = arith.constant 0 : i32
    %c0_i32_1 = arith.constant 0 : i32
    return %c0_i32, %c0_i32_0 : i32, i32
  }
  func.func @transform_1(%arg0: i32) -> (i32, i32) {
    %c0_i32 = arith.constant 0 : i32
    %c0_i32_0 = arith.constant 0 : i32
    return %arg0, %c0_i32 : i32, i32
  }
  func.func @transform_2(%arg0: i32) -> (i32, i32) {
    %c0_i32 = arith.constant 0 : i32
    %c0_i32_0 = arith.constant 0 : i32
    %c0_i32_1 = arith.constant 0 : i32
    return %c0_i32, %c0_i32_0 : i32, i32
  }
  func.func @transform_3(%arg0: i32) -> (i32, i32) {
    %c0_i32 = arith.constant 0 : i32
    %c0_i32_0 = arith.constant 0 : i32
    return %arg0, %c0_i32 : i32, i32
  }
  func.func @transform_4(%arg0: i32) -> (i32, i32) {
    %c0_i32 = arith.constant 0 : i32
    %c0_i32_0 = arith.constant 0 : i32
    return %arg0, %c0_i32 : i32, i32
  }
  func.func @transform_5(%arg0: i32) -> (i32, i32) {
    %c0_i32 = arith.constant 0 : i32
    %c0_i32_0 = arith.constant 0 : i32
    return %arg0, %c0_i32 : i32, i32
  }
}

</mosaic_0001>

<llo_original>
// kernel: tpu_custom_call.1
$region0: #{tpu_custom_call.1}
  #allocation0 [shape = 'u32[]', space=smem, size = 0x4, offset = 0x4, fixed_abs, tag = 'smem constant byte address 0x4 - core index']
  #allocation1 [shape = 'u32[144,128]{1,0:T(1,128)}', space=vmem, size = 0x12000, scoped, tag = 'internal scratch']
  %s0 = inlined_call_operand.vmem [shape: f32[128,128], index: 0, kind: input, shape index: {}]
  %s1 = inlined_call_operand.hbm [shape: f32[128,128], index: 1, kind: input, shape index: {}]
  %s2 = inlined_call_operand.vmem [shape: s32[1,128], index: 2, kind: input, shape index: {}]
  %s3 = inlined_call_operand.vmem [shape: s32[128,1], index: 3, kind: input, shape index: {}]
  %s4 = inlined_call_operand.hbm [shape: f32[128,128], index: 4, kind: output, shape index: {0}]
  %s5 = inlined_call_operand.hbm [shape: f32[128,128], index: 5, kind: output, shape index: {1}]
  %6 = xla_tuple %s4, %s5
  %s7 = sld [smem:[#allocation0]]
  $region38: #{tpu_custom_call.1} parent=0
    _
  %s9 = ssub.s32 1, %s7
  %s10 = scalar_select 0, %s9, %s7
  $region1: #{tpu_custom_call.1} parent=0
    #allocation2 [shape = 'u8[65536]{0}', space=vmem, size = 0x10000, scoped, tag = 'input window, operand 1, single buffered']
    #allocation3 [shape = 's32[1]{0}', space=sflag, size = 0x4, scoped, tag = 'scoped memory for tpu_custom_call.1']
    #allocation4 [shape = 's32[1]{0}', space=sflag, size = 0x4, scoped, tag = 'scoped memory for tpu_custom_call.1']
    #allocation5 [shape = 'u8[65536]{0}', space=vmem, size = 0x10000, scoped, tag = 'output window, operand 0, single buffered']
    #allocation6 [shape = 'u8[65536]{0}', space=vmem, size = 0x10000, scoped, tag = 'output window, operand 1, single buffered']
    #allocation7 [shape = 's32[1]{0}', space=sflag, size = 0x4, scoped, tag = 'scoped memory for tpu_custom_call.1']
    %11 = vsyncpa [#allocation3], 0
    %12 = vsyncpa [#allocation4], 0
    %13 = vsyncpa [#allocation7], 0
    // Predicated region
    $region2: #{tpu_custom_call.1} parent=1 // pred_check
      _
    $region3: #{tpu_custom_call.1} parent=1 // pred_check_branch
      %15 = sbr.rel (0) target = $region5
    $region4: #{tpu_custom_call.1} parent=1 // pred_region
      _
    $region5: #{tpu_custom_call.1} parent=1 // pred_fallthru
      _
    // Predicated region
    $region6: #{tpu_custom_call.1} parent=1 // pred_check
      _
    $region7: #{tpu_custom_call.1} parent=1 // pred_check_branch
      %17 = sbr.rel (0) target = $region9
    $region8: #{tpu_custom_call.1} parent=1 // pred_region
      %s19 = ssub.s32 2048, 2048
      %20 = vsyncadd [#allocation3], %s19
      %s21 = sshll.u32 [#allocation2], 4
      %s22 = int_to_ptr.vmem [resolvable:$true] %s21
      %27 = dma.hbm_to_vmem [thread:$0]  %s1, 2048, %s22, [#allocation3], 128, 128, 8
    $region9: #{tpu_custom_call.1} parent=1 // pred_fallthru
      _
    // Predicated region
    $region10: #{tpu_custom_call.1} parent=1 // pred_check
      _
    $region11: #{tpu_custom_call.1} parent=1 // pred_check_branch
      %29 = sbr.rel (0) target = $region13
    $region12: #{tpu_custom_call.1} parent=1 // pred_region
      _
    $region13: #{tpu_custom_call.1} parent=1 // pred_fallthru
      _
    // Predicated region
    $region14: #{tpu_custom_call.1} parent=1 // pred_check
      _
    $region15: #{tpu_custom_call.1} parent=1 // pred_check_branch
      %31 = sbr.rel (0) target = $region17
    $region16: #{tpu_custom_call.1} parent=1 // pred_region
      _
    $region17: #{tpu_custom_call.1} parent=1 // pred_fallthru
      _
    // Predicated region
    $region18: #{tpu_custom_call.1} parent=1 // pred_check
      _
    $region19: #{tpu_custom_call.1} parent=1 // pred_check_branch
      %33 = sbr.rel (0) target = $region21
    $region20: #{tpu_custom_call.1} parent=1 // pred_region
      %34 = dma.done [#allocation3], 2048
    $region21: #{tpu_custom_call.1} parent=1 // pred_fallthru
      _
    %v35 = vld [vmem:[%s0] sm:$0xff]
    %v36 = vld [vmem:[%s0 + $0x8] sm:$0xff]
    %v37 = vld [vmem:[%s0 + $0x10] sm:$0xff]
    %v38 = vld [vmem:[%s0 + $0x18] sm:$0xff]
    %v39 = vld [vmem:[%s0 + $0x20] sm:$0xff]
    %v40 = vld [vmem:[%s0 + $0x28] sm:$0xff]
    %v41 = vld [vmem:[%s0 + $0x30] sm:$0xff]
    %v42 = vld [vmem:[%s0 + $0x38] sm:$0xff]
    %v43 = vld [vmem:[%s0 + $0x40] sm:$0xff]
    %v44 = vld [vmem:[%s0 + $0x48] sm:$0xff]
    %v45 = vld [vmem:[%s0 + $0x50] sm:$0xff]
    %v46 = vld [vmem:[%s0 + $0x58] sm:$0xff]
    %v47 = vld [vmem:[%s0 + $0x60] sm:$0xff]
    %v48 = vld [vmem:[%s0 + $0x68] sm:$0xff]
    %v49 = vld [vmem:[%s0 + $0x70] sm:$0xff]
    %v50 = vld [vmem:[%s0 + $0x78] sm:$0xff]
    %v51 = vmul.f32 %v35, %v35
    %v52 = vmul.f32 %v36, %v36
    %v53 = vmul.f32 %v37, %v37
    %v54 = vmul.f32 %v38, %v38
    %v55 = vmul.f32 %v39, %v39
    %v56 = vmul.f32 %v40, %v40
    %v57 = vmul.f32 %v41, %v41
    %v58 = vmul.f32 %v42, %v42
    %v59 = vmul.f32 %v43, %v43
    %v60 = vmul.f32 %v44, %v44
    %v61 = vmul.f32 %v45, %v45
    %v62 = vmul.f32 %v46, %v46
    %v63 = vmul.f32 %v47, %v47
    %v64 = vmul.f32 %v48, %v48
    %v65 = vmul.f32 %v49, %v49
    %v66 = vmul.f32 %v50, %v50
    %67 = vadd.xlane.f32.xlu0 %v51
    %v68 = vpop.xlane.xlu0 %67
    %69 = vadd.xlane.f32.xlu0 %v52
    %v70 = vpop.xlane.xlu0 %69
    %71 = vadd.xlane.f32.xlu0 %v53
    %v72 = vpop.xlane.xlu0 %71
    %73 = vadd.xlane.f32.xlu0 %v54
    %v74 = vpop.xlane.xlu0 %73
    %75 = vadd.xlane.f32.xlu0 %v55
    %v76 = vpop.xlane.xlu0 %75
    %77 = vadd.xlane.f32.xlu0 %v56
    %v78 = vpop.xlane.xlu0 %77
    %79 = vadd.xlane.f32.xlu0 %v57
    %v80 = vpop.xlane.xlu0 %79
    %81 = vadd.xlane.f32.xlu0 %v58
    %v82 = vpop.xlane.xlu0 %81
    %83 = vadd.xlane.f32.xlu0 %v59
    %v84 = vpop.xlane.xlu0 %83
    %85 = vadd.xlane.f32.xlu0 %v60
    %v86 = vpop.xlane.xlu0 %85
    %87 = vadd.xlane.f32.xlu0 %v61
    %v88 = vpop.xlane.xlu0 %87
    %89 = vadd.xlane.f32.xlu0 %v62
    %v90 = vpop.xlane.xlu0 %89
    %91 = vadd.xlane.f32.xlu0 %v63
    %v92 = vpop.xlane.xlu0 %91
    %93 = vadd.xlane.f32.xlu0 %v64
    %v94 = vpop.xlane.xlu0 %93
    %95 = vadd.xlane.f32.xlu0 %v65
    %v96 = vpop.xlane.xlu0 %95
    %97 = vadd.xlane.f32.xlu0 %v66
    %v98 = vpop.xlane.xlu0 %97
    %v99 = vmax.f32 %v68, 1e-24
    %v100 = vmax.f32 %v70, 1e-24
    %v101 = vmax.f32 %v72, 1e-24
    %v102 = vmax.f32 %v74, 1e-24
    %v103 = vmax.f32 %v76, 1e-24
    %v104 = vmax.f32 %v78, 1e-24
    %v105 = vmax.f32 %v80, 1e-24
    %v106 = vmax.f32 %v82, 1e-24
    %v107 = vmax.f32 %v84, 1e-24
    %v108 = vmax.f32 %v86, 1e-24
    %v109 = vmax.f32 %v88, 1e-24
    %v110 = vmax.f32 %v90, 1e-24
    %v111 = vmax.f32 %v92, 1e-24
    %v112 = vmax.f32 %v94, 1e-24
    %v113 = vmax.f32 %v96, 1e-24
    %v114 = vmax.f32 %v98, 1e-24
    %v115 = vrsqrt.pop %v99
    %v116 = vrsqrt.pop %v100
    %v117 = vrsqrt.pop %v101
    %v118 = vrsqrt.pop %v102
    %v119 = vrsqrt.pop %v103
    %v120 = vrsqrt.pop %v104
    %v121 = vrsqrt.pop %v105
    %v122 = vrsqrt.pop %v106
    %v123 = vrsqrt.pop %v107
    %v124 = vrsqrt.pop %v108
    %v125 = vrsqrt.pop %v109
    %v126 = vrsqrt.pop %v110
    %v127 = vrsqrt.pop %v111
    %v128 = vrsqrt.pop %v112
    %v129 = vrsqrt.pop %v113
    %v130 = vrsqrt.pop %v114
    %v131 = vmul.f32 %v35, %v115
    %v132 = vmul.f32 %v36, %v116
    %v133 = vmul.f32 %v37, %v117
    %v134 = vmul.f32 %v38, %v118
    %v135 = vmul.f32 %v39, %v119
    %v136 = vmul.f32 %v40, %v120
    %v137 = vmul.f32 %v41, %v121
    %v138 = vmul.f32 %v42, %v122
    %v139 = vmul.f32 %v43, %v123
    %v140 = vmul.f32 %v44, %v124
    %v141 = vmul.f32 %v45, %v125
    %v142 = vmul.f32 %v46, %v126
    %v143 = vmul.f32 %v47, %v127
    %v144 = vmul.f32 %v48, %v128
    %v145 = vmul.f32 %v49, %v129
    %v146 = vmul.f32 %v50, %v130
    %v147 = vld [vmem:[#allocation2] sm:$0xff]
    %v148 = vld [vmem:[#allocation2 + $0x8] sm:$0xff]
    %v149 = vld [vmem:[#allocation2 + $0x10] sm:$0xff]
    %v150 = vld [vmem:[#allocation2 + $0x18] sm:$0xff]
    %v151 = vld [vmem:[#allocation2 + $0x20] sm:$0xff]
    %v152 = vld [vmem:[#allocation2 + $0x28] sm:$0xff]
    %v153 = vld [vmem:[#allocation2 + $0x30] sm:$0xff]
    %v154 = vld [vmem:[#allocation2 + $0x38] sm:$0xff]
    %v155 = vld [vmem:[#allocation2 + $0x40] sm:$0xff]
    %v156 = vld [vmem:[#allocation2 + $0x48] sm:$0xff]
    %v157 = vld [vmem:[#allocation2 + $0x50] sm:$0xff]
    %v158 = vld [vmem:[#allocation2 + $0x58] sm:$0xff]
    %v159 = vld [vmem:[#allocation2 + $0x60] sm:$0xff]
    %v160 = vld [vmem:[#allocation2 + $0x68] sm:$0xff]
    %v161 = vld [vmem:[#allocation2 + $0x70] sm:$0xff]
    %v162 = vld [vmem:[#allocation2 + $0x78] sm:$0xff]
    %v163 = vmul.f32 %v147, %v147
    %v164 = vmul.f32 %v148, %v148
    %v165 = vmul.f32 %v149, %v149
    %v166 = vmul.f32 %v150, %v150
    %v167 = vmul.f32 %v151, %v151
    %v168 = vmul.f32 %v152, %v152
    %v169 = vmul.f32 %v153, %v153
    %v170 = vmul.f32 %v154, %v154
    %v171 = vmul.f32 %v155, %v155
    %v172 = vmul.f32 %v156, %v156
    %v173 = vmul.f32 %v157, %v157
    %v174 = vmul.f32 %v158, %v158
    %v175 = vmul.f32 %v159, %v159
    %v176 = vmul.f32 %v160, %v160
    %v177 = vmul.f32 %v161, %v161
    %v178 = vmul.f32 %v162, %v162
    %179 = vadd.xlane.f32.xlu0 %v163
    %v180 = vpop.xlane.xlu0 %179
    %181 = vadd.xlane.f32.xlu0 %v164
    %v182 = vpop.xlane.xlu0 %181
    %183 = vadd.xlane.f32.xlu0 %v165
    %v184 = vpop.xlane.xlu0 %183
    %185 = vadd.xlane.f32.xlu0 %v166
    %v186 = vpop.xlane.xlu0 %185
    %187 = vadd.xlane.f32.xlu0 %v167
    %v188 = vpop.xlane.xlu0 %187
    %189 = vadd.xlane.f32.xlu0 %v168
    %v190 = vpop.xlane.xlu0 %189
    %191 = vadd.xlane.f32.xlu0 %v169
    %v192 = vpop.xlane.xlu0 %191
    %193 = vadd.xlane.f32.xlu0 %v170
    %v194 = vpop.xlane.xlu0 %193
    %195 = vadd.xlane.f32.xlu0 %v171
    %v196 = vpop.xlane.xlu0 %195
    %197 = vadd.xlane.f32.xlu0 %v172
    %v198 = vpop.xlane.xlu0 %197
    %199 = vadd.xlane.f32.xlu0 %v173
    %v200 = vpop.xlane.xlu0 %199
    %201 = vadd.xlane.f32.xlu0 %v174
    %v202 = vpop.xlane.xlu0 %201
    %203 = vadd.xlane.f32.xlu0 %v175
    %v204 = vpop.xlane.xlu0 %203
    %205 = vadd.xlane.f32.xlu0 %v176
    %v206 = vpop.xlane.xlu0 %205
    %207 = vadd.xlane.f32.xlu0 %v177
    %v208 = vpop.xlane.xlu0 %207
    %209 = vadd.xlane.f32.xlu0 %v178
    %v210 = vpop.xlane.xlu0 %209
    %v211 = vmax.f32 %v180, 1e-24
    %v212 = vmax.f32 %v182, 1e-24
    %v213 = vmax.f32 %v184, 1e-24
    %v214 = vmax.f32 %v186, 1e-24
    %v215 = vmax.f32 %v188, 1e-24
    %v216 = vmax.f32 %v190, 1e-24
    %v217 = vmax.f32 %v192, 1e-24
    %v218 = vmax.f32 %v194, 1e-24
    %v219 = vmax.f32 %v196, 1e-24
    %v220 = vmax.f32 %v198, 1e-24
    %v221 = vmax.f32 %v200, 1e-24
    %v222 = vmax.f32 %v202, 1e-24
    %v223 = vmax.f32 %v204, 1e-24
    %v224 = vmax.f32 %v206, 1e-24
    %v225 = vmax.f32 %v208, 1e-24
    %v226 = vmax.f32 %v210, 1e-24
    %v227 = vrsqrt.pop %v211
    %v228 = vrsqrt.pop %v212
    %v229 = vrsqrt.pop %v213
    %v230 = vrsqrt.pop %v214
    %v231 = vrsqrt.pop %v215
    %v232 = vrsqrt.pop %v216
    %v233 = vrsqrt.pop %v217
    %v234 = vrsqrt.pop %v218
    %v235 = vrsqrt.pop %v219
    %v236 = vrsqrt.pop %v220
    %v237 = vrsqrt.pop %v221
    %v238 = vrsqrt.pop %v222
    %v239 = vrsqrt.pop %v223
    %v240 = vrsqrt.pop %v224
    %v241 = vrsqrt.pop %v225
    %v242 = vrsqrt.pop %v226
    %v243 = vmul.f32 %v147, %v227
    %v244 = vmul.f32 %v148, %v228
    %v245 = vmul.f32 %v149, %v229
    %v246 = vmul.f32 %v150, %v230
    %v247 = vmul.f32 %v151, %v231
    %v248 = vmul.f32 %v152, %v232
    %v249 = vmul.f32 %v153, %v233
    %v250 = vmul.f32 %v154, %v234
    %v251 = vmul.f32 %v155, %v235
    %v252 = vmul.f32 %v156, %v236
    %v253 = vmul.f32 %v157, %v237
    %v254 = vmul.f32 %v158, %v238
    %v255 = vmul.f32 %v159, %v239
    %v256 = vmul.f32 %v160, %v240
    %v257 = vmul.f32 %v161, %v241
    %v258 = vmul.f32 %v162, %v242
    %259 = vmatprep.subr.mxu0 0.0
    %260 = vmatpush1.xpose.msra.mxu0 %v146
    %261 = vmatprep.subr.mxu0 0.0
    %262 = vmatpush1.xpose.msra.mxu0 %v145
    %263 = vmatprep.subr.mxu0 0.0
    %264 = vmatpush1.xpose.msra.mxu0 %v144
    %265 = vmatprep.subr.mxu0 0.0
    %266 = vmatpush1.xpose.msra.mxu0 %v143
    %267 = vmatprep.subr.mxu0 0.0
    %268 = vmatpush1.xpose.msra.mxu0 %v142
    %269 = vmatprep.subr.mxu0 0.0
    %270 = vmatpush1.xpose.msra.mxu0 %v141
    %271 = vmatprep.subr.mxu0 0.0
    %272 = vmatpush1.xpose.msra.mxu0 %v140
    %273 = vmatprep.subr.mxu0 0.0
    %274 = vmatpush1.xpose.msra.mxu0 %v139
    %275 = vmatprep.subr.mxu0 0.0
    %276 = vmatpush1.xpose.msra.mxu0 %v138
    %277 = vmatprep.subr.mxu0 0.0
    %278 = vmatpush1.xpose.msra.mxu0 %v137
    %279 = vmatprep.subr.mxu0 0.0
    %280 = vmatpush1.xpose.msra.mxu0 %v136
    %281 = vmatprep.subr.mxu0 0.0
    %282 = vmatpush1.xpose.msra.mxu0 %v135
    %283 = vmatprep.subr.mxu0 0.0
    %284 = vmatpush1.xpose.msra.mxu0 %v134
    %285 = vmatprep.subr.mxu0 0.0
    %286 = vmatpush1.xpose.msra.mxu0 %v133
    %287 = vmatprep.subr.mxu0 0.0
    %288 = vmatpush1.xpose.msra.mxu0 %v132
    %289 = vmatprep.subr.mxu0 0.0
    %290 = vmatpush1.xpose.msra.mxu0 %v131
    %291 = vmatprep.subr.mxu0 0.0
    %292 = vmatpush2.xpose.msra.mxu0 0.0
    %293 = vmatprep.subr.mxu0 0.0
    %294 = vmatpush2.xpose.msra.mxu0 0.0
    %295 = vmatprep.subr.mxu0 0.0
    %296 = vmatpush2.xpose.msra.mxu0 0.0
    %297 = vmatprep.subr.mxu0 0.0
    %298 = vmatpush2.xpose.msra.mxu0 0.0
    %299 = vmatprep.subr.mxu0 0.0
    %300 = vmatpush2.xpose.msra.mxu0 0.0
    %301 = vmatprep.subr.mxu0 0.0
    %302 = vmatpush2.xpose.msra.mxu0 0.0
    %303 = vmatprep.subr.mxu0 0.0
    %304 = vmatpush2.xpose.msra.mxu0 0.0
    %305 = vmatprep.subr.mxu0 0.0
    %306 = vmatpush2.xpose.msra.mxu0 0.0
    %307 = vmatprep.subr.mxu0 0.0
    %308 = vmatpush2.xpose.msra.mxu0 0.0
    %309 = vmatprep.subr.mxu0 0.0
    %310 = vmatpush2.xpose.msra.mxu0 0.0
    %311 = vmatprep.subr.mxu0 0.0
    %312 = vmatpush2.xpose.msra.mxu0 0.0
    %313 = vmatprep.subr.mxu0 0.0
    %314 = vmatpush2.xpose.msra.mxu0 0.0
    %315 = vmatprep.subr.mxu0 0.0
    %316 = vmatpush2.xpose.msra.mxu0 0.0
    %317 = vmatprep.subr.mxu0 0.0
    %318 = vmatpush2.xpose.msra.mxu0 0.0
    %319 = vmatprep.subr.mxu0 0.0
    %320 = vmatpush2.xpose.msra.mxu0 0.0
    %321 = vmatprep.subr.mxu0 0.0
    %322 = vmatpush2.xpose.msra.mxu0 0.0
    %323 = vmatprep.mubr.f32.mxu0 0.0
    %324 = vmatmul.mubr.f32.gmra.mxu0 %v243
    %v325 = vpop.f32.mrf.mxu0
    %v326 = vadd.f32 0.0, %v325
    %v327 = vpop.f32.mrf.mxu0
    %328 = vmatprep.mubr.f32.mxu0 0.0
    %329 = vmatmul.mubr.f32.gmra.mxu0 %v244
    %v330 = vpop.f32.mrf.mxu0
    %v331 = vadd.f32 0.0, %v330
    %v332 = vpop.f32.mrf.mxu0
    %333 = vmatprep.mubr.f32.mxu0 0.0
    %334 = vmatmul.mubr.f32.gmra.mxu0 %v245
    %v335 = vpop.f32.mrf.mxu0
    %v336 = vadd.f32 0.0, %v335
    %v337 = vpop.f32.mrf.mxu0
    %338 = vmatprep.mubr.f32.mxu0 0.0
    %339 = vmatmul.mubr.f32.gmra.mxu0 %v246
    %v340 = vpop.f32.mrf.mxu0
    %v341 = vadd.f32 0.0, %v340
    %v342 = vpop.f32.mrf.mxu0
    %343 = vmatprep.mubr.f32.mxu0 0.0
    %344 = vmatmul.mubr.f32.gmra.mxu0 %v247
    %v345 = vpop.f32.mrf.mxu0
    %v346 = vadd.f32 0.0, %v345
    %v347 = vpop.f32.mrf.mxu0
    %348 = vmatprep.mubr.f32.mxu0 0.0
    %349 = vmatmul.mubr.f32.gmra.mxu0 %v248
    %v350 = vpop.f32.mrf.mxu0
    %v351 = vadd.f32 0.0, %v350
    %v352 = vpop.f32.mrf.mxu0
    %353 = vmatprep.mubr.f32.mxu0 0.0
    %354 = vmatmul.mubr.f32.gmra.mxu0 %v249
    %v355 = vpop.f32.mrf.mxu0
    %v356 = vadd.f32 0.0, %v355
    %v357 = vpop.f32.mrf.mxu0
    %358 = vmatprep.mubr.f32.mxu0 0.0
    %359 = vmatmul.mubr.f32.gmra.mxu0 %v250
    %v360 = vpop.f32.mrf.mxu0
    %v361 = vadd.f32 0.0, %v360
    %v362 = vpop.f32.mrf.mxu0
    %363 = vmatprep.mubr.f32.mxu0 0.0
    %364 = vmatmul.mubr.f32.gmra.mxu0 %v251
    %v365 = vpop.f32.mrf.mxu0
    %v366 = vadd.f32 0.0, %v365
    %v367 = vpop.f32.mrf.mxu0
    %368 = vmatprep.mubr.f32.mxu0 0.0
    %369 = vmatmul.mubr.f32.gmra.mxu0 %v252
    %v370 = vpop.f32.mrf.mxu0
    %v371 = vadd.f32 0.0, %v370
    %v372 = vpop.f32.mrf.mxu0
    %373 = vmatprep.mubr.f32.mxu0 0.0
    %374 = vmatmul.mubr.f32.gmra.mxu0 %v253
    %v375 = vpop.f32.mrf.mxu0
    %v376 = vadd.f32 0.0, %v375
    %v377 = vpop.f32.mrf.mxu0
    %378 = vmatprep.mubr.f32.mxu0 0.0
    %379 = vmatmul.mubr.f32.gmra.mxu0 %v254
    %v380 = vpop.f32.mrf.mxu0
    %v381 = vadd.f32 0.0, %v380
    %v382 = vpop.f32.mrf.mxu0
    %383 = vmatprep.mubr.f32.mxu0 0.0
    %384 = vmatmul.mubr.f32.gmra.mxu0 %v255
    %v385 = vpop.f32.mrf.mxu0
    %v386 = vadd.f32 0.0, %v385
    %v387 = vpop.f32.mrf.mxu0
    %388 = vmatprep.mubr.f32.mxu0 0.0
    %389 = vmatmul.mubr.f32.gmra.mxu0 %v256
    %v390 = vpop.f32.mrf.mxu0
    %v391 = vadd.f32 0.0, %v390
    %v392 = vpop.f32.mrf.mxu0
    %393 = vmatprep.mubr.f32.mxu0 0.0
    %394 = vmatmul.mubr.f32.gmra.mxu0 %v257
    %v395 = vpop.f32.mrf.mxu0
    %v396 = vadd.f32 0.0, %v395
    %v397 = vpop.f32.mrf.mxu0
    %398 = vmatprep.mubr.f32.mxu0 0.0
    %399 = vmatmul.mubr.f32.gmra.mxu0 %v258
    %v400 = vpop.f32.mrf.mxu0
    %v401 = vadd.f32 0.0, %v400
    %v402 = vpop.f32.mrf.mxu0
    %403 = vdwg.mxu0
    %v404 = vmul.f32 %v326, 2.0
    %v405 = vmul.f32 %v331, 2.0
    %v406 = vmul.f32 %v336, 2.0
    %v407 = vmul.f32 %v341, 2.0
    %v408 = vmul.f32 %v346, 2.0
    %v409 = vmul.f32 %v351, 2.0
    %v410 = vmul.f32 %v356, 2.0
    %v411 = vmul.f32 %v361, 2.0
    %v412 = vmul.f32 %v366, 2.0
    %v413 = vmul.f32 %v371, 2.0
    %v414 = vmul.f32 %v376, 2.0
    %v415 = vmul.f32 %v381, 2.0
    %v416 = vmul.f32 %v386, 2.0
    %v417 = vmul.f32 %v391, 2.0
    %v418 = vmul.f32 %v396, 2.0
    %v419 = vmul.f32 %v401, 2.0
    %v420 = vsub.f32 2.0, %v404
    %v421 = vsub.f32 2.0, %v405
    %v422 = vsub.f32 2.0, %v406
    %v423 = vsub.f32 2.0, %v407
    %v424 = vsub.f32 2.0, %v408
    %v425 = vsub.f32 2.0, %v409
    %v426 = vsub.f32 2.0, %v410
    %v427 = vsub.f32 2.0, %v411
    %v428 = vsub.f32 2.0, %v412
    %v429 = vsub.f32 2.0, %v413
    %v430 = vsub.f32 2.0, %v414
    %v431 = vsub.f32 2.0, %v415
    %v432 = vsub.f32 2.0, %v416
    %v433 = vsub.f32 2.0, %v417
    %v434 = vsub.f32 2.0, %v418
    %v435 = vsub.f32 2.0, %v419
    %v436 = vmax.f32 %v420, 0.0
    %v437 = vmax.f32 %v421, 0.0
    %v438 = vmax.f32 %v422, 0.0
    %v439 = vmax.f32 %v423, 0.0
    %v440 = vmax.f32 %v424, 0.0
    %v441 = vmax.f32 %v425, 0.0
    %v442 = vmax.f32 %v426, 0.0
    %v443 = vmax.f32 %v427, 0.0
    %v444 = vmax.f32 %v428, 0.0
    %v445 = vmax.f32 %v429, 0.0
    %v446 = vmax.f32 %v430, 0.0
    %v447 = vmax.f32 %v431, 0.0
    %v448 = vmax.f32 %v432, 0.0
    %v449 = vmax.f32 %v433, 0.0
    %v450 = vmax.f32 %v434, 0.0
    %v451 = vmax.f32 %v435, 0.0
    %v452 = vrsqrt.pop %v436
    %v453 = vmul.f32 %v436, %v452
    %vm454 = vcmp.eq.f32.partialorder %v436, inf
    %v455 = vsel %vm454, %v436, %v453
    %vm456 = vcmp.eq.f32.partialorder %v436, 0.0
    %v457 = vand.u32 %v436, 2147483648
    %v458 = vsel %vm456, %v457, %v455
    %v459 = vrsqrt.pop %v437
    %v460 = vmul.f32 %v437, %v459
    %vm461 = vcmp.eq.f32.partialorder %v437, inf
    %v462 = vsel %vm461, %v437, %v460
    %vm463 = vcmp.eq.f32.partialorder %v437, 0.0
    %v464 = vand.u32 %v437, 2147483648
    %v465 = vsel %vm463, %v464, %v462
    %v466 = vrsqrt.pop %v438
    %v467 = vmul.f32 %v438, %v466
    %vm468 = vcmp.eq.f32.partialorder %v438, inf
    %v469 = vsel %vm468, %v438, %v467
    %vm470 = vcmp.eq.f32.partialorder %v438, 0.0
    %v471 = vand.u32 %v438, 2147483648
    %v472 = vsel %vm470, %v471, %v469
    %v473 = vrsqrt.pop %v439
    %v474 = vmul.f32 %v439, %v473
    %vm475 = vcmp.eq.f32.partialorder %v439, inf
    %v476 = vsel %vm475, %v439, %v474
    %vm477 = vcmp.eq.f32.partialorder %v439, 0.0
    %v478 = vand.u32 %v439, 2147483648
    %v479 = vsel %vm477, %v478, %v476
    %v480 = vrsqrt.pop %v440
    %v481 = vmul.f32 %v440, %v480
    %vm482 = vcmp.eq.f32.partialorder %v440, inf
    %v483 = vsel %vm482, %v440, %v481
    %vm484 = vcmp.eq.f32.partialorder %v440, 0.0
    %v485 = vand.u32 %v440, 2147483648
    %v486 = vsel %vm484, %v485, %v483
    %v487 = vrsqrt.pop %v441
    %v488 = vmul.f32 %v441, %v487
    %vm489 = vcmp.eq.f32.partialorder %v441, inf
    %v490 = vsel %vm489, %v441, %v488
    %vm491 = vcmp.eq.f32.partialorder %v441, 0.0
    %v492 = vand.u32 %v441, 2147483648
    %v493 = vsel %vm491, %v492, %v490
    %v494 = vrsqrt.pop %v442
    %v495 = vmul.f32 %v442, %v494
    %vm496 = vcmp.eq.f32.partialorder %v442, inf
    %v497 = vsel %vm496, %v442, %v495
    %vm498 = vcmp.eq.f32.partialorder %v442, 0.0
    %v499 = vand.u32 %v442, 2147483648
    %v500 = vsel %vm498, %v499, %v497
    %v501 = vrsqrt.pop %v443
    %v502 = vmul.f32 %v443, %v501
    %vm503 = vcmp.eq.f32.partialorder %v443, inf
    %v504 = vsel %vm503, %v443, %v502
    %vm505 = vcmp.eq.f32.partialorder %v443, 0.0
    %v506 = vand.u32 %v443, 2147483648
    %v507 = vsel %vm505, %v506, %v504
    %v508 = vrsqrt.pop %v444
    %v509 = vmul.f32 %v444, %v508
    %vm510 = vcmp.eq.f32.partialorder %v444, inf
    %v511 = vsel %vm510, %v444, %v509
    %vm512 = vcmp.eq.f32.partialorder %v444, 0.0
    %v513 = vand.u32 %v444, 2147483648
    %v514 = vsel %vm512, %v513, %v511
    %v515 = vrsqrt.pop %v445
    %v516 = vmul.f32 %v445, %v515
    %vm517 = vcmp.eq.f32.partialorder %v445, inf
    %v518 = vsel %vm517, %v445, %v516
    %vm519 = vcmp.eq.f32.partialorder %v445, 0.0
    %v520 = vand.u32 %v445, 2147483648
    %v521 = vsel %vm519, %v520, %v518
    %v522 = vrsqrt.pop %v446
    %v523 = vmul.f32 %v446, %v522
    %vm524 = vcmp.eq.f32.partialorder %v446, inf
    %v525 = vsel %vm524, %v446, %v523
    %vm526 = vcmp.eq.f32.partialorder %v446, 0.0
    %v527 = vand.u32 %v446, 2147483648
    %v528 = vsel %vm526, %v527, %v525
    %v529 = vrsqrt.pop %v447
    %v530 = vmul.f32 %v447, %v529
    %vm531 = vcmp.eq.f32.partialorder %v447, inf
    %v532 = vsel %vm531, %v447, %v530
    %vm533 = vcmp.eq.f32.partialorder %v447, 0.0
    %v534 = vand.u32 %v447, 2147483648
    %v535 = vsel %vm533, %v534, %v532
    %v536 = vrsqrt.pop %v448
    %v537 = vmul.f32 %v448, %v536
    %vm538 = vcmp.eq.f32.partialorder %v448, inf
    %v539 = vsel %vm538, %v448, %v537
    %vm540 = vcmp.eq.f32.partialorder %v448, 0.0
    %v541 = vand.u32 %v448, 2147483648
    %v542 = vsel %vm540, %v541, %v539
    %v543 = vrsqrt.pop %v449
    %v544 = vmul.f32 %v449, %v543
    %vm545 = vcmp.eq.f32.partialorder %v449, inf
    %v546 = vsel %vm545, %v449, %v544
    %vm547 = vcmp.eq.f32.partialorder %v449, 0.0
    %v548 = vand.u32 %v449, 2147483648
    %v549 = vsel %vm547, %v548, %v546
    %v550 = vrsqrt.pop %v450
    %v551 = vmul.f32 %v450, %v550
    %vm552 = vcmp.eq.f32.partialorder %v450, inf
    %v553 = vsel %vm552, %v450, %v551
    %vm554 = vcmp.eq.f32.partialorder %v450, 0.0
    %v555 = vand.u32 %v450, 2147483648
    %v556 = vsel %vm554, %v555, %v553
    %v557 = vrsqrt.pop %v451
    %v558 = vmul.f32 %v451, %v557
    %vm559 = vcmp.eq.f32.partialorder %v451, inf
    %v560 = vsel %vm559, %v451, %v558
    %vm561 = vcmp.eq.f32.partialorder %v451, 0.0
    %v562 = vand.u32 %v451, 2147483648
    %v563 = vsel %vm561, %v562, %v560
    %s564 = smul.u32 0, 128
    %v565 = vlaneseq
    %v566 = vshrl.u32 %v565, 7
    %v567 = vadd.s32 %v566, 8
    %v568 = vadd.s32 %v566, 16
    %v569 = vadd.s32 %v566, 24
    %v570 = vadd.s32 %v566, 32
    %v571 = vadd.s32 %v566, 40
    %v572 = vadd.s32 %v566, 48
    %v573 = vadd.s32 %v566, 56
    %v574 = vadd.s32 %v566, 64
    %v575 = vadd.s32 %v566, 72
    %v576 = vadd.s32 %v566, 80
    %v577 = vadd.s32 %v566, 88
    %v578 = vadd.s32 %v566, 96
    %v579 = vadd.s32 %v566, 104
    %v580 = vadd.s32 %v566, 112
    %v581 = vadd.s32 %v566, 120
    %v582 = vstv %s564
    %v583 = vadd.s32 %v582, %v566
    %v584 = vadd.s32 %v582, %v567
    %v585 = vadd.s32 %v582, %v568
    %v586 = vadd.s32 %v582, %v569
    %v587 = vadd.s32 %v582, %v570
    %v588 = vadd.s32 %v582, %v571
    %v589 = vadd.s32 %v582, %v572
    %v590 = vadd.s32 %v582, %v573
    %v591 = vadd.s32 %v582, %v574
    %v592 = vadd.s32 %v582, %v575
    %v593 = vadd.s32 %v582, %v576
    %v594 = vadd.s32 %v582, %v577
    %v595 = vadd.s32 %v582, %v578
    %v596 = vadd.s32 %v582, %v579
    %v597 = vadd.s32 %v582, %v580
    %v598 = vadd.s32 %v582, %v581
    %v599 = vlaneseq
    %v600 = vand.u32 %v599, 127
    %v601 = vld [vmem:[%s3] sm:$0xff]
    %v602 = vld [vmem:[%s3 + $0x8] sm:$0xff]
    %v603 = vld [vmem:[%s3 + $0x10] sm:$0xff]
    %v604 = vld [vmem:[%s3 + $0x18] sm:$0xff]
    %v605 = vld [vmem:[%s3 + $0x20] sm:$0xff]
    %v606 = vld [vmem:[%s3 + $0x28] sm:$0xff]
    %v607 = vld [vmem:[%s3 + $0x30] sm:$0xff]
    %v608 = vld [vmem:[%s3 + $0x38] sm:$0xff]
    %v609 = vld [vmem:[%s3 + $0x40] sm:$0xff]
    %v610 = vld [vmem:[%s3 + $0x48] sm:$0xff]
    %v611 = vld [vmem:[%s3 + $0x50] sm:$0xff]
    %v612 = vld [vmem:[%s3 + $0x58] sm:$0xff]
    %v613 = vld [vmem:[%s3 + $0x60] sm:$0xff]
    %v614 = vld [vmem:[%s3 + $0x68] sm:$0xff]
    %v615 = vld [vmem:[%s3 + $0x70] sm:$0xff]
    %v616 = vld [vmem:[%s3 + $0x78] sm:$0xff]
    %v617 = vld [vmem:[%s2] sm:$0x1]
    %618 = vset.pattern.permute.xlu0 0
    %619 = vperm.xlu0 %618, %v601
    %v620 = vpop.permute.xlu0 %619
    %621 = vset.pattern.permute.xlu0 0
    %622 = vperm.xlu0 %621, %v602
    %v623 = vpop.permute.xlu0 %622
    %624 = vset.pattern.permute.xlu0 0
    %625 = vperm.xlu0 %624, %v603
    %v626 = vpop.permute.xlu0 %625
    %627 = vset.pattern.permute.xlu0 0
    %628 = vperm.xlu0 %627, %v604
    %v629 = vpop.permute.xlu0 %628
    %630 = vset.pattern.permute.xlu0 0
    %631 = vperm.xlu0 %630, %v605
    %v632 = vpop.permute.xlu0 %631
    %633 = vset.pattern.permute.xlu0 0
    %634 = vperm.xlu0 %633, %v606
    %v635 = vpop.permute.xlu0 %634
    %636 = vset.pattern.permute.xlu0 0
    %637 = vperm.xlu0 %636, %v607
    %v638 = vpop.permute.xlu0 %637
    %639 = vset.pattern.permute.xlu0 0
    %640 = vperm.xlu0 %639, %v608
    %v641 = vpop.permute.xlu0 %640
    %642 = vset.pattern.permute.xlu0 0
    %643 = vperm.xlu0 %642, %v609
    %v644 = vpop.permute.xlu0 %643
    %645 = vset.pattern.permute.xlu0 0
    %646 = vperm.xlu0 %645, %v610
    %v647 = vpop.permute.xlu0 %646
    %648 = vset.pattern.permute.xlu0 0
    %649 = vperm.xlu0 %648, %v611
    %v650 = vpop.permute.xlu0 %649
    %651 = vset.pattern.permute.xlu0 0
    %652 = vperm.xlu0 %651, %v612
    %v653 = vpop.permute.xlu0 %652
    %654 = vset.pattern.permute.xlu0 0
    %655 = vperm.xlu0 %654, %v613
    %v656 = vpop.permute.xlu0 %655
    %657 = vset.pattern.permute.xlu0 0
    %658 = vperm.xlu0 %657, %v614
    %v659 = vpop.permute.xlu0 %658
    %660 = vset.pattern.permute.xlu0 0
    %661 = vperm.xlu0 %660, %v615
    %v662 = vpop.permute.xlu0 %661
    %663 = vset.pattern.permute.xlu0 0
    %664 = vperm.xlu0 %663, %v616
    %v665 = vpop.permute.xlu0 %664
    %v666 = vlaneseq
    %v667 = vshrl.u32 %v666, 7
    %v668 = vsub.s32 0, %v667
    %v669 = vrot.slane %v617, %v668
    %vm670 = vcmp.eq.s32.totalorder %v620, %v669
    %vm671 = vcmp.eq.s32.totalorder %v623, %v669
    %vm672 = vcmp.eq.s32.totalorder %v626, %v669
    %vm673 = vcmp.eq.s32.totalorder %v629, %v669
    %vm674 = vcmp.eq.s32.totalorder %v632, %v669
    %vm675 = vcmp.eq.s32.totalorder %v635, %v669
    %vm676 = vcmp.eq.s32.totalorder %v638, %v669
    %vm677 = vcmp.eq.s32.totalorder %v641, %v669
    %vm678 = vcmp.eq.s32.totalorder %v644, %v669
    %vm679 = vcmp.eq.s32.totalorder %v647, %v669
    %vm680 = vcmp.eq.s32.totalorder %v650, %v669
    %vm681 = vcmp.eq.s32.totalorder %v653, %v669
    %vm682 = vcmp.eq.s32.totalorder %v656, %v669
    %vm683 = vcmp.eq.s32.totalorder %v659, %v669
    %vm684 = vcmp.eq.s32.totalorder %v662, %v669
    %vm685 = vcmp.eq.s32.totalorder %v665, %v669
    %vm686 = vcmp.lt.s32.totalorder %v583, 16
    %vm687 = vcmp.lt.s32.totalorder %v584, 16
    %vm688 = vcmp.lt.s32.totalorder %v585, 16
    %vm689 = vcmp.lt.s32.totalorder %v586, 16
    %vm690 = vcmp.lt.s32.totalorder %v587, 16
    %vm691 = vcmp.lt.s32.totalorder %v588, 16
    %vm692 = vcmp.lt.s32.totalorder %v589, 16
    %vm693 = vcmp.lt.s32.totalorder %v590, 16
    %vm694 = vcmp.lt.s32.totalorder %v591, 16
    %vm695 = vcmp.lt.s32.totalorder %v592, 16
    %vm696 = vcmp.lt.s32.totalorder %v593, 16
    %vm697 = vcmp.lt.s32.totalorder %v594, 16
    %vm698 = vcmp.lt.s32.totalorder %v595, 16
    %vm699 = vcmp.lt.s32.totalorder %v596, 16
    %vm700 = vcmp.lt.s32.totalorder %v597, 16
    %vm701 = vcmp.lt.s32.totalorder %v598, 16
    %vm702 = vcmp.lt.s32.totalorder %v600, 16
    %vm703 = vmand %vm686, %vm702
    %vm704 = vmand %vm687, %vm702
    %vm705 = vmand %vm688, %vm702
    %vm706 = vmand %vm689, %vm702
    %vm707 = vmand %vm690, %vm702
    %vm708 = vmand %vm691, %vm702
    %vm709 = vmand %vm692, %vm702
    %vm710 = vmand %vm693, %vm702
    %vm711 = vmand %vm694, %vm702
    %vm712 = vmand %vm695, %vm702
    %vm713 = vmand %vm696, %vm702
    %vm714 = vmand %vm697, %vm702
    %vm715 = vmand %vm698, %vm702
    %vm716 = vmand %vm699, %vm702
    %vm717 = vmand %vm700, %vm702
    %vm718 = vmand %vm701, %vm702
    %vm719 = vcmp.ne.s32.totalorder %v583, %v600
    %vm720 = vcmp.ne.s32.totalorder %v584, %v600
    %vm721 = vcmp.ne.s32.totalorder %v585, %v600
    %vm722 = vcmp.ne.s32.totalorder %v586, %v600
    %vm723 = vcmp.ne.s32.totalorder %v587, %v600
    %vm724 = vcmp.ne.s32.totalorder %v588, %v600
    %vm725 = vcmp.ne.s32.totalorder %v589, %v600
    %vm726 = vcmp.ne.s32.totalorder %v590, %v600
    %vm727 = vcmp.ne.s32.totalorder %v591, %v600
    %vm728 = vcmp.ne.s32.totalorder %v592, %v600
    %vm729 = vcmp.ne.s32.totalorder %v593, %v600
    %vm730 = vcmp.ne.s32.totalorder %v594, %v600
    %vm731 = vcmp.ne.s32.totalorder %v595, %v600
    %vm732 = vcmp.ne.s32.totalorder %v596, %v600
    %vm733 = vcmp.ne.s32.totalorder %v597, %v600
    %vm734 = vcmp.ne.s32.totalorder %v598, %v600
    %vm735 = vmand %vm670, %vm719
    %vm736 = vmand %vm671, %vm720
    %vm737 = vmand %vm672, %vm721
    %vm738 = vmand %vm673, %vm722
    %vm739 = vmand %vm674, %vm723
    %vm740 = vmand %vm675, %vm724
    %vm741 = vmand %vm676, %vm725
    %vm742 = vmand %vm677, %vm726
    %vm743 = vmand %vm678, %vm727
    %vm744 = vmand %vm679, %vm728
    %vm745 = vmand %vm680, %vm729
    %vm746 = vmand %vm681, %vm730
    %vm747 = vmand %vm682, %vm731
    %vm748 = vmand %vm683, %vm732
    %vm749 = vmand %vm684, %vm733
    %vm750 = vmand %vm685, %vm734
    %vm751 = vmand %vm735, %vm703
    %vm752 = vmand %vm736, %vm704
    %vm753 = vmand %vm737, %vm705
    %vm754 = vmand %vm738, %vm706
    %vm755 = vmand %vm739, %vm707
    %vm756 = vmand %vm740, %vm708
    %vm757 = vmand %vm741, %vm709
    %vm758 = vmand %vm742, %vm710
    %vm759 = vmand %vm743, %vm711
    %vm760 = vmand %vm744, %vm712
    %vm761 = vmand %vm745, %vm713
    %vm762 = vmand %vm746, %vm714
    %vm763 = vmand %vm747, %vm715
    %vm764 = vmand %vm748, %vm716
    %vm765 = vmand %vm749, %vm717
    %vm766 = vmand %vm750, %vm718
    %vm767 = vmxor %vm670, 1
    %vm768 = vmxor %vm671, 1
    %vm769 = vmxor %vm672, 1
    %vm770 = vmxor %vm673, 1
    %vm771 = vmxor %vm674, 1
    %vm772 = vmxor %vm675, 1
    %vm773 = vmxor %vm676, 1
    %vm774 = vmxor %vm677, 1
    %vm775 = vmxor %vm678, 1
    %vm776 = vmxor %vm679, 1
    %vm777 = vmxor %vm680, 1
    %vm778 = vmxor %vm681, 1
    %vm779 = vmxor %vm682, 1
    %vm780 = vmxor %vm683, 1
    %vm781 = vmxor %vm684, 1
    %vm782 = vmxor %vm685, 1
    %vm783 = vmand %vm767, %vm703
    %vm784 = vmand %vm768, %vm704
    %vm785 = vmand %vm769, %vm705
    %vm786 = vmand %vm770, %vm706
    %vm787 = vmand %vm771, %vm707
    %vm788 = vmand %vm772, %vm708
    %vm789 = vmand %vm773, %vm709
    %vm790 = vmand %vm774, %vm710
    %vm791 = vmand %vm775, %vm711
    %vm792 = vmand %vm776, %vm712
    %vm793 = vmand %vm777, %vm713
    %vm794 = vmand %vm778, %vm714
    %vm795 = vmand %vm779, %vm715
    %vm796 = vmand %vm780, %vm716
    %vm797 = vmand %vm781, %vm717
    %vm798 = vmand %vm782, %vm718
    %v799 = vadd.f32 %v458, 0.5
    %v800 = vadd.f32 %v465, 0.5
    %v801 = vadd.f32 %v472, 0.5
    %v802 = vadd.f32 %v479, 0.5
    %v803 = vadd.f32 %v486, 0.5
    %v804 = vadd.f32 %v493, 0.5
    %v805 = vadd.f32 %v500, 0.5
    %v806 = vadd.f32 %v507, 0.5
    %v807 = vadd.f32 %v514, 0.5
    %v808 = vadd.f32 %v521, 0.5
    %v809 = vadd.f32 %v528, 0.5
    %v810 = vadd.f32 %v535, 0.5
    %v811 = vadd.f32 %v542, 0.5
    %v812 = vadd.f32 %v549, 0.5
    %v813 = vadd.f32 %v556, 0.5
    %v814 = vadd.f32 %v563, 0.5
    %v815 = vsel %vm751, %v799, 1e+09
    %v816 = vsel %vm752, %v800, 1e+09
    %v817 = vsel %vm753, %v801, 1e+09
    %v818 = vsel %vm754, %v802, 1e+09
    %v819 = vsel %vm755, %v803, 1e+09
    %v820 = vsel %vm756, %v804, 1e+09
    %v821 = vsel %vm757, %v805, 1e+09
    %v822 = vsel %vm758, %v806, 1e+09
    %v823 = vsel %vm759, %v807, 1e+09
    %v824 = vsel %vm760, %v808, 1e+09
    %v825 = vsel %vm761, %v809, 1e+09
    %v826 = vsel %vm762, %v810, 1e+09
    %v827 = vsel %vm763, %v811, 1e+09
    %v828 = vsel %vm764, %v812, 1e+09
    %v829 = vsel %vm765, %v813, 1e+09
    %v830 = vsel %vm766, %v814, 1e+09
    %831 = vst [vmem:[#allocation5] sm:$0xff] %v815
    %832 = vst [vmem:[#allocation5 + $0x8] sm:$0xff] %v816
    %833 = vst [vmem:[#allocation5 + $0x10] sm:$0xff] %v817
    %834 = vst [vmem:[#allocation5 + $0x18] sm:$0xff] %v818
    %835 = vst [vmem:[#allocation5 + $0x20] sm:$0xff] %v819
    %836 = vst [vmem:[#allocation5 + $0x28] sm:$0xff] %v820
    %837 = vst [vmem:[#allocation5 + $0x30] sm:$0xff] %v821
    %838 = vst [vmem:[#allocation5 + $0x38] sm:$0xff] %v822
    %839 = vst [vmem:[#allocation5 + $0x40] sm:$0xff] %v823
    %840 = vst [vmem:[#allocation5 + $0x48] sm:$0xff] %v824
    %841 = vst [vmem:[#allocation5 + $0x50] sm:$0xff] %v825
    %842 = vst [vmem:[#allocation5 + $0x58] sm:$0xff] %v826
    %843 = vst [vmem:[#allocation5 + $0x60] sm:$0xff] %v827
    %844 = vst [vmem:[#allocation5 + $0x68] sm:$0xff] %v828
    %845 = vst [vmem:[#allocation5 + $0x70] sm:$0xff] %v829
    %846 = vst [vmem:[#allocation5 + $0x78] sm:$0xff] %v830
    %v847 = vsel %vm783, %v458, -1e+09
    %v848 = vsel %vm784, %v465, -1e+09
    %v849 = vsel %vm785, %v472, -1e+09
    %v850 = vsel %vm786, %v479, -1e+09
    %v851 = vsel %vm787, %v486, -1e+09
    %v852 = vsel %vm788, %v493, -1e+09
    %v853 = vsel %vm789, %v500, -1e+09
    %v854 = vsel %vm790, %v507, -1e+09
    %v855 = vsel %vm791, %v514, -1e+09
    %v856 = vsel %vm792, %v521, -1e+09
    %v857 = vsel %vm793, %v528, -1e+09
    %v858 = vsel %vm794, %v535, -1e+09
    %v859 = vsel %vm795, %v542, -1e+09
    %v860 = vsel %vm796, %v549, -1e+09
    %v861 = vsel %vm797, %v556, -1e+09
    %v862 = vsel %vm798, %v563, -1e+09
    %863 = vst [vmem:[#allocation6] sm:$0xff] %v847
    %864 = vst [vmem:[#allocation6 + $0x8] sm:$0xff] %v848
    %865 = vst [vmem:[#allocation6 + $0x10] sm:$0xff] %v849
    %866 = vst [vmem:[#allocation6 + $0x18] sm:$0xff] %v850
    %867 = vst [vmem:[#allocation6 + $0x20] sm:$0xff] %v851
    %868 = vst [vmem:[#allocation6 + $0x28] sm:$0xff] %v852
    %869 = vst [vmem:[#allocation6 + $0x30] sm:$0xff] %v853
    %870 = vst [vmem:[#allocation6 + $0x38] sm:$0xff] %v854
    %871 = vst [vmem:[#allocation6 + $0x40] sm:$0xff] %v855
    %872 = vst [vmem:[#allocation6 + $0x48] sm:$0xff] %v856
    %873 = vst [vmem:[#allocation6 + $0x50] sm:$0xff] %v857
    %874 = vst [vmem:[#allocation6 + $0x58] sm:$0xff] %v858
    %875 = vst [vmem:[#allocation6 + $0x60] sm:$0xff] %v859
    %876 = vst [vmem:[#allocation6 + $0x68] sm:$0xff] %v860
    %877 = vst [vmem:[#allocation6 + $0x70] sm:$0xff] %v861
    %878 = vst [vmem:[#allocation6 + $0x78] sm:$0xff] %v862
    // Predicated region
    $region22: #{tpu_custom_call.1} parent=1 // pred_check
      _
    $region23: #{tpu_custom_call.1} parent=1 // pred_check_branch
      %880 = sbr.rel (0) target = $region25
    $region24: #{tpu_custom_call.1} parent=1 // pred_region
      %s882 = ssub.s32 2048, 2048
      %883 = vsyncadd [#allocation4], %s882
      %s884 = sshll.u32 [#allocation5], 4
      %s885 = int_to_ptr.vmem [resolvable:$true] %s884
      %890 = dma.vmem_to_hbm [thread:$0]  %s885, 2048, %s4, [#allocation4], 128, 128, 8
    $region25: #{tpu_custom_call.1} parent=1 // pred_fallthru
      _
    // Predicated region
    $region26: #{tpu_custom_call.1} parent=1 // pred_check
      _
    $region27: #{tpu_custom_call.1} parent=1 // pred_check_branch
      %892 = sbr.rel (0) target = $region29
    $region28: #{tpu_custom_call.1} parent=1 // pred_region
      %s894 = ssub.s32 2048, 2048
      %895 = vsyncadd [#allocation7], %s894
      %s896 = sshll.u32 [#allocation6], 4
      %s897 = int_to_ptr.vmem [resolvable:$true] %s896
      %902 = dma.vmem_to_hbm [thread:$0]  %s897, 2048, %s5, [#allocation7], 128, 128, 8
    $region29: #{tpu_custom_call.1} parent=1 // pred_fallthru
      _
    // Predicated region
    $region30: #{tpu_custom_call.1} parent=1 // pred_check
      _
    $region31: #{tpu_custom_call.1} parent=1 // pred_check_branch
      %904 = sbr.rel (0) target = $region33
    $region32: #{tpu_custom_call.1} parent=1 // pred_region
      %905 = dma.done [#allocation4], 2048
    $region33: #{tpu_custom_call.1} parent=1 // pred_fallthru
      _
    // Predicated region
    $region34: #{tpu_custom_call.1} parent=1 // pred_check
      _
    $region35: #{tpu_custom_call.1} parent=1 // pred_check_branch
      %907 = sbr.rel (0) target = $region37
    $region36: #{tpu_custom_call.1} parent=1 // pred_region
      %908 = dma.done [#allocation7], 2048
    $region37: #{tpu_custom_call.1} parent=1 // pred_fallthru
      _
    %909 = vsyncpa [#allocation3], 1
    %910 = vsyncpa [#allocation4], 1
    %911 = vsyncpa [#allocation7], 1

</llo_original>
